<compile_context>
chip_gen: v6e
topology: v6e:2x2x1
jax: 0.10.0
libtpu: 0.0.40
codegen_flags: <defaults>
</compile_context>

<pallas_src>
import jax
import jax.numpy as jnp
from jax import lax
from jax.experimental import pallas as pl
from jax.experimental.pallas import tpu as pltpu


def _cdiv(a, b):
    return -(-a // b)


def _round_up(n, m):
    return _cdiv(n, m) * m


def _voronoi_kernel(f_ref, f2_ref, x_ref, o_ref, best_ref, proj_ref):
    # f_ref   : (TK, Dp)  codebook chunk (auto-pipelined across the K grid axis)
    # f2_ref  : (1, TK)   f32 squared row norms, +inf on padded rows
    # x_ref   : (TB, Dp)  query tile (resident across the K axis)
    # o_ref   : (TB, Dp)  projected output tile (resident across the K axis)
    # best_ref: (TB, 1)   f32 scratch — running min score
    # proj_ref: (TB, Dp)  f32 scratch — running projected rows
    k = pl.program_id(2)

    @pl.when(k == 0)
    def _init():
        best_ref[...] = jnp.full_like(best_ref, jnp.inf)
        proj_ref[...] = jnp.zeros_like(proj_ref)

    cdt = jnp.promote_types(f_ref.dtype, x_ref.dtype)
    X = x_ref[...].astype(cdt)                           # (TB, Dp) native MXU dtype
    Fc = f_ref[...].astype(cdt)                          # (TK, Dp)
    TB = X.shape[0]
    TK = Fc.shape[0]

    # Fold the -2 into the (small) query operand: exact power-of-two scale,
    # saves a (TB, TK) multiply on the score.
    Xm2 = X * jnp.asarray(-2.0, dtype=cdt)

    # (-2 x) . f^T without transposing F: contract last dims of both operands.
    xf = lax.dot_general(Xm2, Fc, (((1,), (1,)), ((), ())),
                         preferred_element_type=jnp.float32)          # (TB, TK)
    score = f2_ref[...] + xf                                          # f32 combine

    cmin = jnp.min(score, axis=-1, keepdims=True)                     # (TB, 1)
    cidx = jnp.argmin(score, axis=-1)                                 # (TB,) first-min
    col = lax.broadcasted_iota(jnp.int32, (TB, TK), 1)
    onehot = (cidx[:, None] == col).astype(cdt)                       # exact 0/1
    cproj = lax.dot_general(onehot, Fc, (((1,), (0,)), ((), ())),
                            preferred_element_type=jnp.float32)       # (TB, Dp) gather

    upd = cmin < best_ref[...]        # strict '<': earlier chunk wins ties
    best_ref[...] = jnp.where(upd, cmin, best_ref[...])
    proj_ref[...] = jnp.where(upd, cproj, proj_ref[...])

    @pl.when(k == pl.num_programs(2) - 1)
    def _store():
        o_ref[...] = proj_ref[...].astype(o_ref.dtype)


def voronoi_projection(F, x, *, tb=None, tk=None):
    """F: (I, K, D), x: (I, B, D) -> (I, B, D) (F's dtype, matching torch.gather)."""
    assert F.ndim == 3 and x.ndim == 3
    assert F.shape[-1] == x.shape[-1] and F.shape[0] == x.shape[0]
    I, K, D = F.shape
    _, B, _ = x.shape
    out_dtype = F.dtype

    # ---- lane / MXU aligned tile sizes --------------------------------------
    Dp = _round_up(max(D, 128), 128)                 # lane-dense output store

    if tb is None:
        TB = min(512 if Dp <= 512 else 256, _round_up(B, 8))
    else:
        assert tb % 8 == 0, "tb must be a multiple of 8"
        TB = tb
    Bp = _round_up(B, TB)
    n_b = Bp // TB

    if tk is None:
        tk_cap = 2048 if Dp <= 256 else (1024 if Dp <= 512 else 512)
        K128 = _round_up(K, 128)
        n_k = _cdiv(K128, tk_cap)
        TK = _round_up(_cdiv(K128, n_k), 128)        # balanced, lane-aligned chunks
    else:
        assert tk % 128 == 0, "tk must be a multiple of 128"
        TK = tk
        n_k = _cdiv(K, TK)
    Kp = TK * n_k

    # ---- pad to aligned shapes (zeros; padded K rows neutralized below) -----
    Fp = F if (Kp, Dp) == (K, D) else jnp.pad(F, ((0, 0), (0, Kp - K), (0, Dp - D)))
    xp = x if (Bp, Dp) == (B, D) else jnp.pad(x, ((0, 0), (0, Bp - B), (0, Dp - D)))

    # ||f||^2 hoisted out of the kernel / B loop: computed once per codebook,
    # delivered lane-major; padded rows get +inf so they never win the argmin.
    f2 = jnp.sum(Fp.astype(jnp.float32) ** 2, axis=-1)                 # (I, Kp)
    f2 = jnp.where((jnp.arange(Kp) < K)[None, :], f2, jnp.inf)
    f2 = f2[:, None, :]                                                # (I, 1, Kp)

    grid_spec = pltpu.PrefetchScalarGridSpec(
        num_scalar_prefetch=0,
        grid=(I, n_b, n_k),
        in_specs=[
            # Codebook chunk: indexed only by (i, k) -> resident across B-tiles
            # when n_k == 1, auto-pipelined streaming otherwise.
            pl.BlockSpec((pl.Squeezed(), TK, Dp), lambda i, b, k: (i, k, 0)),
            pl.BlockSpec((pl.Squeezed(), 1, TK), lambda i, b, k: (i, 0, k)),
            # Query tile: resident across the K axis.
            pl.BlockSpec((pl.Squeezed(), TB, Dp), lambda i, b, k: (i, b, 0)),
        ],
        out_specs=pl.BlockSpec((pl.Squeezed(), TB, Dp), lambda i, b, k: (i, b, 0)),
        scratch_shapes=[
            pltpu.VMEM((TB, 1), jnp.float32),        # running min score
            pltpu.VMEM((TB, Dp), jnp.float32),       # running projection
        ],
    )

    # ---- explicit VMEM budget (double-buffered blocks + in-kernel temporaries) ----
    fb = jnp.dtype(F.dtype).itemsize
    xb = jnp.dtype(x.dtype).itemsize
    ob = jnp.dtype(out_dtype).itemsize
    cb = max(fb, xb)
    est = (2 * TK * Dp * fb            # F chunk (double-buffered)
           + 2 * 8 * TK * 4            # f2 chunk
           + 2 * TB * Dp * xb          # x tile
           + 2 * TB * Dp * ob          # out tile
           + TB * (Dp + 128) * 4       # scratch accumulators
           + TB * TK * (8 + cb)        # score / iota / one-hot temporaries
           + TB * Dp * (4 + cb)        # chunk projection + scaled query
           + TK * Dp * cb              # F cast (budgeted even if dtypes match)
           + (4 << 20))                # headroom
    vmem_limit = int(min(max(est, 16 << 20), 48 << 20))   # clear of v7x's 64 MiB

    out = pl.pallas_call(
        _voronoi_kernel,
        out_shape=jax.ShapeDtypeStruct((I, Bp, Dp), out_dtype),
        grid_spec=grid_spec,
        compiler_params=pltpu.CompilerParams(
            dimension_semantics=("parallel", "parallel", "arbitrary"),
            vmem_limit_bytes=vmem_limit,
        ),
    )(Fp, f2, xp)

    return out[:, :B, :D]


def _reference(F, x):
    # Pure-JAX reference of the PyTorch forward (squared-Euclidean distance_fn).
    dist = jnp.sum((x[:, :, None, :] - F[:, None, :, :]) ** 2, axis=-1)  # (I,B,K)
    idx = jnp.argmin(dist, axis=-1)                                      # (I,B)
    return jnp.take_along_axis(F, idx[..., None], axis=1)                # (I,B,D)


if __name__ == "__main__":
    key = jax.random.PRNGKey(0)
    kF, kx, kF2, kx2 = jax.random.split(key, 4)

    # Test 1: small shapes — single K chunk, codebook resident across query tiles.
    I, K, B, D = 2, 16, 8, 32
    F = jax.random.normal(kF, (I, K, D), dtype=jnp.float32)
    x = jax.random.normal(kx, (I, B, D), dtype=jnp.float32)
    out = jax.block_until_ready(voronoi_projection(F, x))
    ref = _reference(F, x)
    assert out.shape == (I, B, D)
    assert jnp.allclose(out, ref, atol=1e-5), "mismatch vs reference (test 1)"

    # Test 2: forces the multi-chunk K accumulator path plus B/K/D padding.
    I2, K2, B2, D2 = 1, 300, 50, 40
    F2 = jax.random.normal(kF2, (I2, K2, D2), dtype=jnp.float32)
    x2 = jax.random.normal(kx2, (I2, B2, D2), dtype=jnp.float32)
    out2 = jax.block_until_ready(voronoi_projection(F2, x2, tb=16, tk=128))
    ref2 = _reference(F2, x2)
    assert out2.shape == (I2, B2, D2)
    assert jnp.allclose(out2, ref2, atol=1e-5), "mismatch vs reference (test 2)"

    print("KERNEL_OK")
</pallas_src>

<mosaic_0001>
module attributes {stable_mosaic.version = 11 : i64} {
  func.func @_voronoi_kernel(%arg0: i32, %arg1: i32, %arg2: i32, %arg3: memref<1x128x128xf32, #tpu.memory_space<vmem>>, %arg4: memref<1x1x128xf32, #tpu.memory_space<vmem>>, %arg5: memref<1x8x128xf32, #tpu.memory_space<vmem>>, %arg6: memref<1x8x128xf32, #tpu.memory_space<vmem>>, %arg7: memref<8x1xf32, #tpu.memory_space<vmem>>, %arg8: memref<8x128xf32, #tpu.memory_space<vmem>>) attributes {dimension_semantics = [#tpu.dimension_semantics<parallel>, #tpu.dimension_semantics<parallel>, #tpu.dimension_semantics<arbitrary>], iteration_bounds = array<i64: 2, 1, 1>, scalar_prefetch = 0 : i64, scratch_operands = 2 : i64, tpu.core_type = #tpu.core_type<tc>, window_params = [{transform_indices = @transform_0, window_bounds = array<i64: 1, 128, 128>}, {transform_indices = @transform_1, window_bounds = array<i64: 1, 1, 128>}, {transform_indices = @transform_2, window_bounds = array<i64: 1, 8, 128>}, {transform_indices = @transform_3, window_bounds = array<i64: 1, 8, 128>}]} {
    %c0_i32 = arith.constant 0 : i32
    %0 = arith.cmpi eq, %arg2, %c0_i32 : i32
    %1 = arith.extui %0 : i1 to i32
    %c0_i32_0 = arith.constant 0 : i32
    %2 = arith.cmpi ne, %1, %c0_i32_0 : i32
    scf.if %2 {
      %cst_24 = arith.constant 0x7F800000 : f32
      %37 = vector.broadcast %cst_24 : f32 to vector<8x1xf32>
      %c0_25 = arith.constant 0 : index
      %c0_26 = arith.constant 0 : index
      %38 = vector.load %arg7[%c0_25, %c0_26] : memref<8x1xf32, #tpu.memory_space<vmem>>, vector<8x1xf32>
      tpu.vector_store %arg7[%c0_25, %c0_26], %37 {strides = array<i32>} : memref<8x1xf32, #tpu.memory_space<vmem>>, vector<8x1xf32>,
      %cst_27 = arith.constant 0.000000e+00 : f32
      %39 = vector.broadcast %cst_27 : f32 to vector<8x128xf32>
      %c0_28 = arith.constant 0 : index
      %c0_29 = arith.constant 0 : index
      %40 = vector.load %arg8[%c0_28, %c0_29] : memref<8x128xf32, #tpu.memory_space<vmem>>, vector<8x128xf32>
      tpu.vector_store %arg8[%c0_28, %c0_29], %39 {strides = array<i32>} : memref<8x128xf32, #tpu.memory_space<vmem>>, vector<8x128xf32>,
    } else {
    }
    %c0 = arith.constant 0 : index
    %c0_1 = arith.constant 0 : index
    %c0_2 = arith.constant 0 : index
    %3 = vector.load %arg5[%c0, %c0_1, %c0_2] : memref<1x8x128xf32, #tpu.memory_space<vmem>>, vector<1x8x128xf32>
    %4 = vector.shape_cast %3 : vector<1x8x128xf32> to vector<8x128xf32>
    %c0_3 = arith.constant 0 : index
    %c0_4 = arith.constant 0 : index
    %c0_5 = arith.constant 0 : index
    %5 = vector.load %arg3[%c0_3, %c0_4, %c0_5] : memref<1x128x128xf32, #tpu.memory_space<vmem>>, vector<1x128x128xf32>
    %6 = vector.shape_cast %5 : vector<1x128x128xf32> to vector<128x128xf32>
    %cst = arith.constant -2.000000e+00 : f32
    %7 = vector.broadcast %cst : f32 to vector<8x128xf32>
    %8 = arith.mulf %4, %7 : vector<8x128xf32>
    %cst_6 = arith.constant dense<0.000000e+00> : vector<8x128xf32>
    %9 = tpu.matmul %8, %6, %cst_6 {dimension_numbers = #tpu.dot_dimension_numbers<[1], [1], [0], [0], [0, 0, 1, 0], [], []>} : vector<8x128xf32>, vector<128x128xf32>, vector<8x128xf32> -> vector<8x128xf32>
    %c0_7 = arith.constant 0 : index
    %c0_8 = arith.constant 0 : index
    %c0_9 = arith.constant 0 : index
    %10 = vector.load %arg4[%c0_7, %c0_8, %c0_9] : memref<1x1x128xf32, #tpu.memory_space<vmem>>, vector<1x1x128xf32>
    %11 = vector.shape_cast %10 : vector<1x1x128xf32> to vector<1x128xf32>
    %12 = vector.broadcast %11 : vector<1x128xf32> to vector<8x128xf32>
    %13 = arith.addf %12, %9 : vector<8x128xf32>
    %cst_10 = arith.constant dense<0x7F800000> : vector<8xf32>
    %14 = vector.multi_reduction <minimumf>, %13, %cst_10 [1] : vector<8x128xf32> to vector<8xf32>
    %15 = vector.shape_cast %14 : vector<8xf32> to vector<8x1xf32>
    %16 = tpu.reduce_index %13 {axis = 1 : i32, kind = #tpu.reduction_kind<arg_min>} : vector<8x128xf32> -> vector<8xi32>
    %17 = tpu.iota {dimensions = array<i32: 1>} : vector<8x128xi32>
    %18 = vector.shape_cast %16 : vector<8xi32> to vector<8x1xi32>
    %19 = vector.broadcast %18 : vector<8x1xi32> to vector<8x128xi32>
    %20 = arith.cmpi eq, %19, %17 : vector<8x128xi32>
    %21 = arith.extui %20 : vector<8x128xi1> to vector<8x128xi32>
    %22 = arith.sitofp %21 : vector<8x128xi32> to vector<8x128xf32>
    %cst_11 = arith.constant dense<0.000000e+00> : vector<8x128xf32>
    %23 = tpu.matmul %22, %6, %cst_11 {dimension_numbers = #tpu.dot_dimension_numbers<[1], [0], [0], [1], [0, 0, 1, 1], [], []>} : vector<8x128xf32>, vector<128x128xf32>, vector<8x128xf32> -> vector<8x128xf32>
    %c0_12 = arith.constant 0 : index
    %c0_13 = arith.constant 0 : index
    %24 = vector.load %arg7[%c0_12, %c0_13] : memref<8x1xf32, #tpu.memory_space<vmem>>, vector<8x1xf32>
    %25 = arith.cmpf olt, %15, %24 : vector<8x1xf32>
    %c0_14 = arith.constant 0 : index
    %c0_15 = arith.constant 0 : index
    %26 = vector.load %arg7[%c0_14, %c0_15] : memref<8x1xf32, #tpu.memory_space<vmem>>, vector<8x1xf32>
    %27 = arith.select %25, %15, %26 : vector<8x1xi1>, vector<8x1xf32>
    %c0_16 = arith.constant 0 : index
    %c0_17 = arith.constant 0 : index
    %28 = vector.load %arg7[%c0_16, %c0_17] : memref<8x1xf32, #tpu.memory_space<vmem>>, vector<8x1xf32>
    tpu.vector_store %arg7[%c0_16, %c0_17], %27 {strides = array<i32>} : memref<8x1xf32, #tpu.memory_space<vmem>>, vector<8x1xf32>,
    %c0_18 = arith.constant 0 : index
    %c0_19 = arith.constant 0 : index
    %29 = vector.load %arg8[%c0_18, %c0_19] : memref<8x128xf32, #tpu.memory_space<vmem>>, vector<8x128xf32>
    %30 = vector.shape_cast %25 : vector<8x1xi1> to vector<8x1xi1>
    %31 = vector.broadcast %30 : vector<8x1xi1> to vector<8x128xi1>
    %32 = arith.select %31, %23, %29 : vector<8x128xi1>, vector<8x128xf32>
    %c0_20 = arith.constant 0 : index
    %c0_21 = arith.constant 0 : index
    %33 = vector.load %arg8[%c0_20, %c0_21] : memref<8x128xf32, #tpu.memory_space<vmem>>, vector<8x128xf32>
    tpu.vector_store %arg8[%c0_20, %c0_21], %32 {strides = array<i32>} : memref<8x128xf32, #tpu.memory_space<vmem>>, vector<8x128xf32>,
    %c0_i32_22 = arith.constant 0 : i32
    %34 = arith.cmpi eq, %arg2, %c0_i32_22 : i32
    %35 = arith.extui %34 : i1 to i32
    %c0_i32_23 = arith.constant 0 : i32
    %36 = arith.cmpi ne, %35, %c0_i32_23 : i32
    scf.if %36 {
      %c0_24 = arith.constant 0 : index
      %c0_25 = arith.constant 0 : index
      %37 = vector.load %arg8[%c0_24, %c0_25] : memref<8x128xf32, #tpu.memory_space<vmem>>, vector<8x128xf32>
      %c0_26 = arith.constant 0 : index
      %c0_27 = arith.constant 0 : index
      %c0_28 = arith.constant 0 : index
      %38 = vector.load %arg6[%c0_26, %c0_27, %c0_28] : memref<1x8x128xf32, #tpu.memory_space<vmem>>, vector<1x8x128xf32>
      %39 = vector.shape_cast %38 : vector<1x8x128xf32> to vector<8x128xf32>
      %40 = vector.shape_cast %37 : vector<8x128xf32> to vector<1x8x128xf32>
      tpu.vector_store %arg6[%c0_26, %c0_27, %c0_28], %40 {strides = array<i32>} : memref<1x8x128xf32, #tpu.memory_space<vmem>>, vector<1x8x128xf32>,
    } else {
    }
    return
  }
  func.func @transform_0(%arg0: i32, %arg1: i32, %arg2: i32) -> (i32, i32, i32) {
    %c0_i32 = arith.constant 0 : i32
    %c0_i32_0 = arith.constant 0 : i32
    return %arg0, %arg2, %c0_i32 : i32, i32, i32
  }
  func.func @transform_1(%arg0: i32, %arg1: i32, %arg2: i32) -> (i32, i32, i32) {
    %c0_i32 = arith.constant 0 : i32
    %c0_i32_0 = arith.constant 0 : i32
    return %arg0, %c0_i32, %arg2 : i32, i32, i32
  }
  func.func @transform_2(%arg0: i32, %arg1: i32, %arg2: i32) -> (i32, i32, i32) {
    %c0_i32 = arith.constant 0 : i32
    %c0_i32_0 = arith.constant 0 : i32
    return %arg0, %arg1, %c0_i32 : i32, i32, i32
  }
  func.func @transform_3(%arg0: i32, %arg1: i32, %arg2: i32) -> (i32, i32, i32) {
    %c0_i32 = arith.constant 0 : i32
    %c0_i32_0 = arith.constant 0 : i32
    return %arg0, %arg1, %c0_i32 : i32, i32, i32
  }
}

</mosaic_0001>

<llo_original>
// kernel: tpu_custom_call.1
$region0: #{tpu_custom_call.1}
  #allocation0 [shape = 'u32[]', space=smem, size = 0x4, offset = 0x4, fixed_abs, tag = 'smem constant byte address 0x4 - core index']
  #allocation1 [shape = 'u32[144,128]{1,0:T(1,128)}', space=vmem, size = 0x12000, scoped, tag = 'internal scratch']
  #allocation2 [shape = 'f32[8,1]{1,0:T(8,128)}', space=vmem, size = 0x1000, scoped, tag = 'scratch operand']
  #allocation3 [shape = 'f32[8,128]{1,0:T(8,128)}', space=vmem, size = 0x1000, scoped, tag = 'scratch operand']
  %s0 = inlined_call_operand.hbm [shape: f32[2,128,128], index: 0, kind: input, shape index: {}]
  %s1 = inlined_call_operand.hbm [shape: f32[2,1,128], index: 1, kind: input, shape index: {}]
  %s2 = inlined_call_operand.hbm [shape: f32[2,8,128], index: 2, kind: input, shape index: {}]
  %s3 = inlined_call_operand.hbm [shape: f32[2,8,128], index: 3, kind: output, shape index: {}]
  %s4 = sld [smem:[#allocation0]]
  $region65: #{tpu_custom_call.1} parent=0
    _
  %s6 = ssub.s32 1, %s4
  %s7 = scalar_select 0, %s6, %s4
  $region1: #{tpu_custom_call.1} parent=0
    #allocation4 [shape = 'u8[131072]{0}', space=vmem, size = 0x20000, scoped, tag = 'input window, operand 0']
    #allocation5 [shape = 's32[2]{0}', space=sflag, size = 0x8, scoped, tag = 'scoped memory for tpu_custom_call.1']
    #allocation6 [shape = 's32[2]{0}', space=sflag, size = 0x8, scoped, tag = 'scoped memory for tpu_custom_call.1']
    #allocation7 [shape = 'u8[1024]{0}', space=vmem, size = 0x400, scoped, tag = 'input window, operand 1']
    #allocation8 [shape = 's32[2]{0}', space=sflag, size = 0x8, scoped, tag = 'scoped memory for tpu_custom_call.1']
    #allocation9 [shape = 'u8[8192]{0}', space=vmem, size = 0x2000, scoped, tag = 'input window, operand 2']
    #allocation10 [shape = 'u8[8192]{0}', space=vmem, size = 0x2000, scoped, tag = 'output window, operand 0']
    %8 = vsyncpa [#allocation5], 0
    %s9 = scalar_lea.sflag [#allocation5], 1
    %10 = vsyncpa %s9, 0
    %11 = vsyncpa [#allocation8], 0
    %s12 = scalar_lea.sflag [#allocation8], 1
    %13 = vsyncpa %s12, 0
    %14 = vsyncpa [#allocation6], 0
    %s15 = scalar_lea.sflag [#allocation6], 1
    %16 = vsyncpa %s15, 0
    loop: start=0, step=1, limit=4
    $region2: #{tpu_custom_call.1} parent=1 // loop_pre_header
      _
    $region3: #{tpu_custom_call.1} parent=1 // loop_header
      %s18 = sphi 0, %s22
      %p19 = scmp.ge.s32.totalorder %s18, 4
      %s25 = sphi 0, %s44
      %s26 = sphi 0, %s40
      %s27 = sphi 0, %s36
      %s28 = sphi 0, %s25
      %s29 = sphi 0, %s26
      %s30 = sphi 0, %s27
      %s31 = sphi 0, %s28
      %s32 = sphi 0, %s29
      %s33 = sphi 0, %s30
      %s49 = sphi 0, %s51
      %s52 = sphi 0, %s49
      %s53 = sphi 0, %s52
      %s69 = sphi 0, %s53
      %s77 = sphi 0, %s79
      %s80 = sphi 0, %s77
      %s81 = sphi 0, %s80
      %s97 = sphi 0, %s81
      %s105 = sphi 0, %s107
      %s108 = sphi 0, %s105
      %s109 = sphi 0, %s108
      %s125 = sphi 0, %s109
      %s133 = sphi 0, %s135
      %s136 = sphi 0, %s133
      %s137 = sphi 0, %s136
      %s153 = sphi 0, %s137
    $region4: #{tpu_custom_call.1} parent=1 // loop_header_branch
      %21 = sbr.rel (%p19) target = $region8
    $region5: #{tpu_custom_call.1} parent=1 // loop_body
      %s23 = ssub.s32 %s18, 1
      %s24 = ssub.s32 %s18, 2
      %s34 = sadd.s32 1, %s27
      %p35 = scmp.ge.s32.totalorder %s34, 1
      %s36 = scalar_select %p35, 0, %s34
      %s37 = sadd.s32 1, %s26
      %s38 = scalar_select %p35, %s37, %s26
      %p39 = scmp.ge.s32.totalorder %s38, 1
      %s40 = scalar_select %p39, 0, %s38
      %s41 = sadd.s32 1, %s25
      %s42 = scalar_select %p39, %s41, %s25
      %p43 = scmp.ge.s32.totalorder %s42, 2
      %s44 = scalar_select %p43, 0, %s42
      %s45 = ssub.s32 %s25, %s44
      %s46 = ssub.s32 %s27, %s36
      %s47 = sor.u32 %s45, %s46
      %p48 = scmp.eq.s32.totalorder %s47, 0
      %s50 = sadd.s32 %s49, 1
      %s51 = scalar_select %p48, %s49, %s50
      %p54 = pneg %p48
      %p55 = scmp.eq.s32.totalorder %s18, 1
      %p56 = por %p54, %p55
      %p57 = scmp.ne.s32.totalorder %s49, %s52
      %p58 = scmp.eq.s32.totalorder %s18, 0
      %p59 = por %p57, %p58
      %p60 = scmp.ne.s32.totalorder %s49, %s52
      %p61 = scmp.eq.s32.totalorder %s23, 1
      %p62 = por %p60, %p61
      %p63 = scmp.ne.s32.totalorder %s52, %s53
      %p64 = scmp.eq.s32.totalorder %s23, 0
      %p65 = por %p63, %p64
      %p66 = scmp.ne.s32.totalorder %s52, %s53
      %p67 = scmp.eq.s32.totalorder %s24, 1
      %p68 = por %p66, %p67
      %p70 = scmp.ne.s32.totalorder %s53, %s69
      %p71 = scmp.eq.s32.totalorder %s24, 0
      %p72 = por %p70, %p71
      %s73 = ssub.s32 %s25, %s44
      %s74 = ssub.s32 %s27, %s36
      %s75 = sor.u32 %s73, %s74
      %p76 = scmp.eq.s32.totalorder %s75, 0
      %s78 = sadd.s32 %s77, 1
      %s79 = scalar_select %p76, %s77, %s78
      %p82 = pneg %p76
      %p83 = scmp.eq.s32.totalorder %s18, 1
      %p84 = por %p82, %p83
      %p85 = scmp.ne.s32.totalorder %s77, %s80
      %p86 = scmp.eq.s32.totalorder %s18, 0
      %p87 = por %p85, %p86
      %p88 = scmp.ne.s32.totalorder %s77, %s80
      %p89 = scmp.eq.s32.totalorder %s23, 1
      %p90 = por %p88, %p89
      %p91 = scmp.ne.s32.totalorder %s80, %s81
      %p92 = scmp.eq.s32.totalorder %s23, 0
      %p93 = por %p91, %p92
      %p94 = scmp.ne.s32.totalorder %s80, %s81
      %p95 = scmp.eq.s32.totalorder %s24, 1
      %p96 = por %p94, %p95
      %p98 = scmp.ne.s32.totalorder %s81, %s97
      %p99 = scmp.eq.s32.totalorder %s24, 0
      %p100 = por %p98, %p99
      %s101 = ssub.s32 %s25, %s44
      %s102 = ssub.s32 %s26, %s40
      %s103 = sor.u32 %s101, %s102
      %p104 = scmp.eq.s32.totalorder %s103, 0
      %s106 = sadd.s32 %s105, 1
      %s107 = scalar_select %p104, %s105, %s106
      %p110 = pneg %p104
      %p111 = scmp.eq.s32.totalorder %s18, 1
      %p112 = por %p110, %p111
      %p113 = scmp.ne.s32.totalorder %s105, %s108
      %p114 = scmp.eq.s32.totalorder %s18, 0
      %p115 = por %p113, %p114
      %p116 = scmp.ne.s32.totalorder %s105, %s108
      %p117 = scmp.eq.s32.totalorder %s23, 1
      %p118 = por %p116, %p117
      %p119 = scmp.ne.s32.totalorder %s108, %s109
      %p120 = scmp.eq.s32.totalorder %s23, 0
      %p121 = por %p119, %p120
      %p122 = scmp.ne.s32.totalorder %s108, %s109
      %p123 = scmp.eq.s32.totalorder %s24, 1
      %p124 = por %p122, %p123
      %p126 = scmp.ne.s32.totalorder %s109, %s125
      %p127 = scmp.eq.s32.totalorder %s24, 0
      %p128 = por %p126, %p127
      %s129 = ssub.s32 %s25, %s44
      %s130 = ssub.s32 %s26, %s40
      %s131 = sor.u32 %s129, %s130
      %p132 = scmp.eq.s32.totalorder %s131, 0
      %s134 = sadd.s32 %s133, 1
      %s135 = scalar_select %p132, %s133, %s134
      %p138 = pneg %p132
      %p139 = scmp.eq.s32.totalorder %s18, 1
      %p140 = por %p138, %p139
      %p141 = scmp.ne.s32.totalorder %s133, %s136
      %p142 = scmp.eq.s32.totalorder %s18, 0
      %p143 = por %p141, %p142
      %p144 = scmp.ne.s32.totalorder %s133, %s136
      %p145 = scmp.eq.s32.totalorder %s23, 1
      %p146 = por %p144, %p145
      %p147 = scmp.ne.s32.totalorder %s136, %s137
      %p148 = scmp.eq.s32.totalorder %s23, 0
      %p149 = por %p147, %p148
      %p150 = scmp.ne.s32.totalorder %s136, %s137
      %p151 = scmp.eq.s32.totalorder %s24, 1
      %p152 = por %p150, %p151
      %p154 = scmp.ne.s32.totalorder %s137, %s153
      %p155 = scmp.eq.s32.totalorder %s24, 0
      %p156 = por %p154, %p155
      %p157 = scmp.le.s32.totalorder 1, %s18
      %p158 = scmp.lt.s32.totalorder %s18, 3
      %p159 = pnand %p157, %p158
      %p160 = pneg %p159
      // Predicated region
      $region9: #{tpu_custom_call.1} parent=5 // pred_check
        _
      $region10: #{tpu_custom_call.1} parent=5 // pred_check_branch
        %162 = sbr.rel (%p159) target = $region12
      $region11: #{tpu_custom_call.1} parent=5 // pred_region
        %s163 = ssub.s32 %s18, 1
      $region12: #{tpu_custom_call.1} parent=5 // pred_fallthru
        _
      %p164 = scmp.lt.s32.totalorder %s18, 2
      // Predicated region
      $region13: #{tpu_custom_call.1} parent=5 // pred_check
        %p165 = pneg %p164
      $region14: #{tpu_custom_call.1} parent=5 // pred_check_branch
        %167 = sbr.rel (%p165) target = $region16
      $region15: #{tpu_custom_call.1} parent=5 // pred_region
        // Predicated region
        $region17: #{tpu_custom_call.1} parent=15 // pred_check
          %p168 = pneg %p59
        $region18: #{tpu_custom_call.1} parent=15 // pred_check_branch
          %170 = sbr.rel (%p168) target = $region20
        $region19: #{tpu_custom_call.1} parent=15 // pred_region
          %s171 = sand.u32 %s49, 1
          %s172 = scalar_lea.sflag [#allocation5], %s171
          %s173 = sand.u32 %s49, 1
          %s174 = smul.addr %s173, 128
          %s175 = scalar_lea.vmem [#allocation4], %s174
          %s176 = smul.u32 16, %s27
          %s178 = ssub.s32 2048, 2048
          %179 = vsyncadd %s172, %s178
          %s180 = smul.addr %s25, 16
          %s181 = sadd.s32 %s176, %s180
          %s182 = smul.addr %s181, 128
          %s183 = scalar_lea.hbm %s0, %s182
          %s184 = sshll.u32 %s175, 4
          %s185 = int_to_ptr.vmem [resolvable:$true] %s184
          %190 = dma.hbm_to_vmem [thread:$0]  %s183, 2048, %s185, %s172, 128, 128, 8
        $region20: #{tpu_custom_call.1} parent=15 // pred_fallthru
          _
        // Predicated region
        $region21: #{tpu_custom_call.1} parent=15 // pred_check
          %p191 = pneg %p87
        $region22: #{tpu_custom_call.1} parent=15 // pred_check_branch
          %193 = sbr.rel (%p191) target = $region24
        $region23: #{tpu_custom_call.1} parent=15 // pred_region
          %s194 = sand.u32 %s18, 1
          %s195 = scalar_lea.sflag [#allocation8], %s194
          %s196 = sand.u32 %s77, 1
          %s197 = scalar_lea.vmem [#allocation7], %s196
          %s199 = ssub.s32 16, 16
          %200 = vsyncadd %s195, %s199
          %s201 = sadd.s32 %s27, %s25
          %s202 = smul.addr %s201, 16
          %s203 = scalar_lea.hbm %s1, %s202
          %s205 = sshll.u32 %s197, 4
          %s206 = int_to_ptr.vmem [resolvable:$true] %s205
          %208 = dma.hbm_to_vmem [thread:$0]  %s203, 16, %s206, %s195
        $region24: #{tpu_custom_call.1} parent=15 // pred_fallthru
          _
        // Predicated region
        $region25: #{tpu_custom_call.1} parent=15 // pred_check
          %p209 = pneg %p115
        $region26: #{tpu_custom_call.1} parent=15 // pred_check_branch
          %211 = sbr.rel (%p209) target = $region28
        $region27: #{tpu_custom_call.1} parent=15 // pred_region
          %s212 = sand.u32 %s18, 1
          %s213 = scalar_lea.sflag [#allocation8], %s212
          %s214 = sand.u32 %s105, 1
          %s215 = smul.addr %s214, 8
          %s216 = scalar_lea.vmem [#allocation9], %s215
          %s218 = ssub.s32 128, 128
          %219 = vsyncadd %s213, %s218
          %s220 = sadd.s32 %s26, %s25
          %s221 = smul.addr %s220, 128
          %s222 = scalar_lea.hbm %s2, %s221
          %s224 = sshll.u32 %s216, 4
          %s225 = int_to_ptr.vmem [resolvable:$true] %s224
          %227 = dma.hbm_to_vmem [thread:$0]  %s222, 128, %s225, %s213
        $region28: #{tpu_custom_call.1} parent=15 // pred_fallthru
          _
      $region16: #{tpu_custom_call.1} parent=5 // pred_fallthru
        _
      %p228 = scmp.le.s32.totalorder 1, %s18
      %p229 = scmp.lt.s32.totalorder %s18, 3
      %p230 = pnand %p228, %p229
      %p231 = pneg %p230
      // Predicated region
      $region29: #{tpu_custom_call.1} parent=5 // pred_check
        _
      $region30: #{tpu_custom_call.1} parent=5 // pred_check_branch
        %233 = sbr.rel (%p230) target = $region32
      $region31: #{tpu_custom_call.1} parent=5 // pred_region
        %s234 = ssub.s32 %s18, 1
        %s235 = sand.u32 %s52, 1
        %s236 = scalar_lea.sflag [#allocation5], %s235
        %s237 = sand.u32 %s52, 1
        %s238 = smul.addr %s237, 128
        %s239 = scalar_lea.vmem [#allocation4], %s238
        // Predicated region
        $region33: #{tpu_custom_call.1} parent=31 // pred_check
          %p240 = pneg %p65
        $region34: #{tpu_custom_call.1} parent=31 // pred_check_branch
          %242 = sbr.rel (%p240) target = $region36
        $region35: #{tpu_custom_call.1} parent=31 // pred_region
          %243 = dma.done %s236, 2048
        $region36: #{tpu_custom_call.1} parent=31 // pred_fallthru
          _
        %s244 = sand.u32 %s23, 1
        %s245 = scalar_lea.sflag [#allocation8], %s244
        %s246 = sand.u32 %s80, 1
        %s247 = scalar_lea.vmem [#allocation7], %s246
        // Predicated region
        $region37: #{tpu_custom_call.1} parent=31 // pred_check
          %p248 = pneg %p93
        $region38: #{tpu_custom_call.1} parent=31 // pred_check_branch
          %250 = sbr.rel (%p248) target = $region40
        $region39: #{tpu_custom_call.1} parent=31 // pred_region
          %251 = dma.done %s245, 16
        $region40: #{tpu_custom_call.1} parent=31 // pred_fallthru
          _
        %s252 = sand.u32 %s23, 1
        %s253 = scalar_lea.sflag [#allocation8], %s252
        %s254 = sand.u32 %s108, 1
        %s255 = smul.addr %s254, 8
        %s256 = scalar_lea.vmem [#allocation9], %s255
        // Predicated region
        $region41: #{tpu_custom_call.1} parent=31 // pred_check
          %p257 = pneg %p121
        $region42: #{tpu_custom_call.1} parent=31 // pred_check_branch
          %259 = sbr.rel (%p257) target = $region44
        $region43: #{tpu_custom_call.1} parent=31 // pred_region
          %260 = dma.done %s253, 128
        $region44: #{tpu_custom_call.1} parent=31 // pred_fallthru
          _
        %s261 = sand.u32 %s52, 1
        %s262 = scalar_lea.sflag [#allocation5], %s261
        %s263 = sand.u32 %s52, 1
        %s264 = smul.addr %s263, 128
        %s265 = scalar_lea.vmem [#allocation4], %s264
        %p266 = pneg %p65
        %p267 = pneg %p62
        %s268 = sand.u32 %s23, 1
        %s269 = scalar_lea.sflag [#allocation8], %s268
        %s270 = sand.u32 %s80, 1
        %s271 = scalar_lea.vmem [#allocation7], %s270
        %p272 = pneg %p93
        %p273 = pneg %p90
        %s274 = sand.u32 %s23, 1
        %s275 = scalar_lea.sflag [#allocation8], %s274
        %s276 = sand.u32 %s108, 1
        %s277 = smul.addr %s276, 8
        %s278 = scalar_lea.vmem [#allocation9], %s277
        %p279 = pneg %p121
        %p280 = pneg %p118
        %p281 = pneg %p149
        %p282 = pneg %p146
        %s283 = sand.u32 %s136, 1
        %s284 = scalar_lea.sflag [#allocation6], %s283
        %s285 = sand.u32 %s136, 1
        %s286 = smul.addr %s285, 8
        %s287 = scalar_lea.vmem [#allocation10], %s286
        %s288 = smul.u32 16, %s30
        %p289 = scmp.eq.s32.totalorder %s30, 0
        // Predicated region
        $region45: #{tpu_custom_call.1} parent=31 // pred_check
          %p290 = pneg %p289
        $region46: #{tpu_custom_call.1} parent=31 // pred_check_branch
          %292 = sbr.rel (%p290) target = $region48
        $region47: #{tpu_custom_call.1} parent=31 // pred_region
          %vm293 = vcmask 7168
          %294 = vst.msk [vmem:[#allocation2] sm:$0xff] %vm293, inf
          %295 = vst [vmem:[#allocation3] sm:$0xff] 0.0
        $region48: #{tpu_custom_call.1} parent=31 // pred_fallthru
          _
        %v296 = vld [vmem:[%s256] sm:$0xff]
        %v297 = vld [vmem:[%s239] sm:$0xff]
        %v298 = vld [vmem:[%s239 + $0x8] sm:$0xff]
        %v299 = vld [vmem:[%s239 + $0x10] sm:$0xff]
        %v300 = vld [vmem:[%s239 + $0x18] sm:$0xff]
        %v301 = vld [vmem:[%s239 + $0x20] sm:$0xff]
        %v302 = vld [vmem:[%s239 + $0x28] sm:$0xff]
        %v303 = vld [vmem:[%s239 + $0x30] sm:$0xff]
        %v304 = vld [vmem:[%s239 + $0x38] sm:$0xff]
        %v305 = vld [vmem:[%s239 + $0x40] sm:$0xff]
        %v306 = vld [vmem:[%s239 + $0x48] sm:$0xff]
        %v307 = vld [vmem:[%s239 + $0x50] sm:$0xff]
        %v308 = vld [vmem:[%s239 + $0x58] sm:$0xff]
        %v309 = vld [vmem:[%s239 + $0x60] sm:$0xff]
        %v310 = vld [vmem:[%s239 + $0x68] sm:$0xff]
        %v311 = vld [vmem:[%s239 + $0x70] sm:$0xff]
        %v312 = vld [vmem:[%s239 + $0x78] sm:$0xff]
        %v313 = vmul.f32 %v296, -2.0
        %314 = vmatprep.subr.mxu0 0.0
        %315 = vmatpush1.xpose.msra.mxu0 %v312
        %316 = vmatprep.subr.mxu0 0.0
        %317 = vmatpush1.xpose.msra.mxu0 %v311
        %318 = vmatprep.subr.mxu0 0.0
        %319 = vmatpush1.xpose.msra.mxu0 %v310
        %320 = vmatprep.subr.mxu0 0.0
        %321 = vmatpush1.xpose.msra.mxu0 %v309
        %322 = vmatprep.subr.mxu0 0.0
        %323 = vmatpush1.xpose.msra.mxu0 %v308
        %324 = vmatprep.subr.mxu0 0.0
        %325 = vmatpush1.xpose.msra.mxu0 %v307
        %326 = vmatprep.subr.mxu0 0.0
        %327 = vmatpush1.xpose.msra.mxu0 %v306
        %328 = vmatprep.subr.mxu0 0.0
        %329 = vmatpush1.xpose.msra.mxu0 %v305
        %330 = vmatprep.subr.mxu0 0.0
        %331 = vmatpush1.xpose.msra.mxu0 %v304
        %332 = vmatprep.subr.mxu0 0.0
        %333 = vmatpush1.xpose.msra.mxu0 %v303
        %334 = vmatprep.subr.mxu0 0.0
        %335 = vmatpush1.xpose.msra.mxu0 %v302
        %336 = vmatprep.subr.mxu0 0.0
        %337 = vmatpush1.xpose.msra.mxu0 %v301
        %338 = vmatprep.subr.mxu0 0.0
        %339 = vmatpush1.xpose.msra.mxu0 %v300
        %340 = vmatprep.subr.mxu0 0.0
        %341 = vmatpush1.xpose.msra.mxu0 %v299
        %342 = vmatprep.subr.mxu0 0.0
        %343 = vmatpush1.xpose.msra.mxu0 %v298
        %344 = vmatprep.subr.mxu0 0.0
        %345 = vmatpush1.xpose.msra.mxu0 %v297
        %346 = vmatprep.subr.mxu0 0.0
        %347 = vmatpush2.xpose.msra.mxu0 0.0
        %348 = vmatprep.subr.mxu0 0.0
        %349 = vmatpush2.xpose.msra.mxu0 0.0
        %350 = vmatprep.subr.mxu0 0.0
        %351 = vmatpush2.xpose.msra.mxu0 0.0
        %352 = vmatprep.subr.mxu0 0.0
        %353 = vmatpush2.xpose.msra.mxu0 0.0
        %354 = vmatprep.subr.mxu0 0.0
        %355 = vmatpush2.xpose.msra.mxu0 0.0
        %356 = vmatprep.subr.mxu0 0.0
        %357 = vmatpush2.xpose.msra.mxu0 0.0
        %358 = vmatprep.subr.mxu0 0.0
        %359 = vmatpush2.xpose.msra.mxu0 0.0
        %360 = vmatprep.subr.mxu0 0.0
        %361 = vmatpush2.xpose.msra.mxu0 0.0
        %362 = vmatprep.subr.mxu0 0.0
        %363 = vmatpush2.xpose.msra.mxu0 0.0
        %364 = vmatprep.subr.mxu0 0.0
        %365 = vmatpush2.xpose.msra.mxu0 0.0
        %366 = vmatprep.subr.mxu0 0.0
        %367 = vmatpush2.xpose.msra.mxu0 0.0
        %368 = vmatprep.subr.mxu0 0.0
        %369 = vmatpush2.xpose.msra.mxu0 0.0
        %370 = vmatprep.subr.mxu0 0.0
        %371 = vmatpush2.xpose.msra.mxu0 0.0
        %372 = vmatprep.subr.mxu0 0.0
        %373 = vmatpush2.xpose.msra.mxu0 0.0
        %374 = vmatprep.subr.mxu0 0.0
        %375 = vmatpush2.xpose.msra.mxu0 0.0
        %376 = vmatprep.subr.mxu0 0.0
        %377 = vmatpush2.xpose.msra.mxu0 0.0
        %378 = vmatprep.mubr.f32.mxu0 0.0
        %379 = vmatmul.mubr.f32.gmra.mxu0 %v313
        %v380 = vpop.f32.mrf.mxu0
        %v381 = vadd.f32 0.0, %v380
        %v382 = vpop.f32.mrf.mxu0
        %383 = vdwg.mxu0
        %v384 = vld [vmem:[%s247] sm:$0x1]
        %v386 = vlaneseq
        %v387 = vshrl.u32 %v386, 7
        %v388 = vsub.s32 0, %v387
        %v389 = vrot.slane %v384, %v388
        %v391 = vadd.f32 %v389, %v381
        %392 = vmin.xlane.f32.xlu0 %v391
        %v393 = vpop.xlane.xlu0 %392
        %394 = vmin.index.xlane.f32.xlu0 %v391
        %v395 = vpop.xlane.xlu0 %394
        %v396 = vlaneseq
        %v397 = vand.u32 %v396, 127
        %vm398 = vcmp.eq.s32.totalorder %v395, %v397
        %v399 = vsel %vm398, 1, 0
        %v400 = vcvt.s32.f32 %v399
        %401 = vmatprep.subr.mxu0 0.0
        %402 = vmatpush1.msra.mxu0 %v312
        %403 = vmatprep.subr.mxu0 0.0
        %404 = vmatpush1.msra.mxu0 %v311
        %405 = vmatprep.subr.mxu0 0.0
        %406 = vmatpush1.msra.mxu0 %v310
        %407 = vmatprep.subr.mxu0 0.0
        %408 = vmatpush1.msra.mxu0 %v309
        %409 = vmatprep.subr.mxu0 0.0
        %410 = vmatpush1.msra.mxu0 %v308
        %411 = vmatprep.subr.mxu0 0.0
        %412 = vmatpush1.msra.mxu0 %v307
        %413 = vmatprep.subr.mxu0 0.0
        %414 = vmatpush1.msra.mxu0 %v306
        %415 = vmatprep.subr.mxu0 0.0
        %416 = vmatpush1.msra.mxu0 %v305
        %417 = vmatprep.subr.mxu0 0.0
        %418 = vmatpush1.msra.mxu0 %v304
        %419 = vmatprep.subr.mxu0 0.0
        %420 = vmatpush1.msra.mxu0 %v303
        %421 = vmatprep.subr.mxu0 0.0
        %422 = vmatpush1.msra.mxu0 %v302
        %423 = vmatprep.subr.mxu0 0.0
        %424 = vmatpush1.msra.mxu0 %v301
        %425 = vmatprep.subr.mxu0 0.0
        %426 = vmatpush1.msra.mxu0 %v300
        %427 = vmatprep.subr.mxu0 0.0
        %428 = vmatpush1.msra.mxu0 %v299
        %429 = vmatprep.subr.mxu0 0.0
        %430 = vmatpush1.msra.mxu0 %v298
        %431 = vmatprep.subr.mxu0 0.0
        %432 = vmatpush1.msra.mxu0 %v297
        %433 = vmatprep.subr.mxu0 0.0
        %434 = vmatpush2.msra.mxu0 0.0
        %435 = vmatprep.subr.mxu0 0.0
        %436 = vmatpush2.msra.mxu0 0.0
        %437 = vmatprep.subr.mxu0 0.0
        %438 = vmatpush2.msra.mxu0 0.0
        %439 = vmatprep.subr.mxu0 0.0
        %440 = vmatpush2.msra.mxu0 0.0
        %441 = vmatprep.subr.mxu0 0.0
        %442 = vmatpush2.msra.mxu0 0.0
        %443 = vmatprep.subr.mxu0 0.0
        %444 = vmatpush2.msra.mxu0 0.0
        %445 = vmatprep.subr.mxu0 0.0
        %446 = vmatpush2.msra.mxu0 0.0
        %447 = vmatprep.subr.mxu0 0.0
        %448 = vmatpush2.msra.mxu0 0.0
        %449 = vmatprep.subr.mxu0 0.0
        %450 = vmatpush2.msra.mxu0 0.0
        %451 = vmatprep.subr.mxu0 0.0
        %452 = vmatpush2.msra.mxu0 0.0
        %453 = vmatprep.subr.mxu0 0.0
        %454 = vmatpush2.msra.mxu0 0.0
        %455 = vmatprep.subr.mxu0 0.0
        %456 = vmatpush2.msra.mxu0 0.0
        %457 = vmatprep.subr.mxu0 0.0
        %458 = vmatpush2.msra.mxu0 0.0
        %459 = vmatprep.subr.mxu0 0.0
        %460 = vmatpush2.msra.mxu0 0.0
        %461 = vmatprep.subr.mxu0 0.0
        %462 = vmatpush2.msra.mxu0 0.0
        %463 = vmatprep.subr.mxu0 0.0
        %464 = vmatpush2.msra.mxu0 0.0
        %465 = vmatprep.mubr.f32.mxu0 0.0
        %466 = vmatmul.mubr.f32.gmra.mxu0 %v400
        %v467 = vpop.f32.mrf.mxu0
        %v468 = vadd.f32 0.0, %v467
        %v469 = vpop.f32.mrf.mxu0
        %470 = vdwg.mxu0
        %v471 = vld [vmem:[#allocation2] sm:$0xff]
        %vm472 = vcmp.lt.f32.partialorder %v393, %v471
        %v473 = vsel %vm472, %v393, %v471
        %vm474 = vcmask 7168
        %475 = vst.msk [vmem:[#allocation2] sm:$0xff] %vm474, %v473
        %v476 = vld [vmem:[#allocation3] sm:$0xff]
        %v477 = vsel %vm472, 1, 0
        %478 = vset.pattern.permute.xlu0 0
        %479 = vperm.xlu0 %478, %v477
        %v480 = vpop.permute.xlu0 %479
        %vm481 = vcmp.eq.s32.totalorder %v480, 1
        %v482 = vsel %vm481, %v468, %v476
        %483 = vst [vmem:[#allocation3] sm:$0xff] %v482
        // Predicated region
        $region49: #{tpu_custom_call.1} parent=31 // pred_check
          %p484 = pneg %p289
        $region50: #{tpu_custom_call.1} parent=31 // pred_check_branch
          %486 = sbr.rel (%p484) target = $region52
        $region51: #{tpu_custom_call.1} parent=31 // pred_region
          %v487 = vld [vmem:[#allocation3] sm:$0xff]
          %488 = vst [vmem:[%s287] sm:$0xff] %v487
        $region52: #{tpu_custom_call.1} parent=31 // pred_fallthru
          _
        %s489 = sand.u32 %s136, 1
        %s490 = scalar_lea.sflag [#allocation6], %s489
        %s491 = sand.u32 %s136, 1
        %s492 = smul.addr %s491, 8
        %s493 = scalar_lea.vmem [#allocation10], %s492
        // Predicated region
        $region53: #{tpu_custom_call.1} parent=31 // pred_check
          %p494 = pneg %p146
        $region54: #{tpu_custom_call.1} parent=31 // pred_check_branch
          %496 = sbr.rel (%p494) target = $region56
        $region55: #{tpu_custom_call.1} parent=31 // pred_region
          %s498 = ssub.s32 128, 128
          %499 = vsyncadd %s490, %s498
          %s500 = sadd.s32 %s29, %s28
          %s501 = smul.addr %s500, 128
          %s502 = scalar_lea.hbm %s3, %s501
          %s504 = sshll.u32 %s493, 4
          %s505 = int_to_ptr.vmem [resolvable:$true] %s504
          %507 = dma.vmem_to_hbm [thread:$0]  %s505, 128, %s502, %s490
        $region56: #{tpu_custom_call.1} parent=31 // pred_fallthru
          _
      $region32: #{tpu_custom_call.1} parent=5 // pred_fallthru
        _
      %p508 = scmp.le.s32.totalorder 2, %s18
      // Predicated region
      $region57: #{tpu_custom_call.1} parent=5 // pred_check
        %p509 = pneg %p508
      $region58: #{tpu_custom_call.1} parent=5 // pred_check_branch
        %511 = sbr.rel (%p509) target = $region60
      $region59: #{tpu_custom_call.1} parent=5 // pred_region
        %s512 = ssub.s32 %s18, 2
        // Predicated region
        $region61: #{tpu_custom_call.1} parent=59 // pred_check
          %p513 = pneg %p152
        $region62: #{tpu_custom_call.1} parent=59 // pred_check_branch
          %515 = sbr.rel (%p513) target = $region64
        $region63: #{tpu_custom_call.1} parent=59 // pred_region
          %s516 = sand.u32 %s137, 1
          %s517 = scalar_lea.sflag [#allocation6], %s516
          %s518 = sand.u32 %s137, 1
          %s519 = smul.addr %s518, 8
          %s520 = scalar_lea.vmem [#allocation10], %s519
          %521 = dma.done %s517, 128
        $region64: #{tpu_custom_call.1} parent=59 // pred_fallthru
          _
      $region60: #{tpu_custom_call.1} parent=5 // pred_fallthru
        _
    $region6: #{tpu_custom_call.1} parent=1 // loop_footer
      %s22 = sadd.s32 1, %s18
    $region7: #{tpu_custom_call.1} parent=1 // loop_footer_branch
      %17 = sbr.rel target = $region3
    $region8: #{tpu_custom_call.1} parent=1 // loop_exit
      _
    %522 = vsyncpa [#allocation5], 1
    %s523 = scalar_lea.sflag [#allocation5], 1
    %524 = vsyncpa %s523, 1
    %525 = vsyncpa [#allocation8], 1
    %s526 = scalar_lea.sflag [#allocation8], 1
    %527 = vsyncpa %s526, 1
    %528 = vsyncpa [#allocation6], 1
    %s529 = scalar_lea.sflag [#allocation6], 1
    %530 = vsyncpa %s529, 1

</llo_original>
